<compile_context>
chip_gen: v5e
topology: v5e:2x2
jax: 0.10.0
libtpu: 0.0.40
codegen_flags: <defaults>
</compile_context>

<pallas_src>
import functools

import jax
import jax.numpy as jnp
from jax.experimental import pallas as pl
from jax.experimental.pallas import tpu as pltpu

LANES = 128
SUBLANES = 8
DEFAULT_ROW_TILE = 4096  # (4096, 128) f32 = 2 MiB per pipeline buffer


def _round_up(x, m):
    return (x + m - 1) // m * m


def _sublane_pack(dtype):
    # Native sublane packing: 8 rows for 4-byte, 16 for 2-byte, 32 for 1-byte.
    itemsize = jnp.dtype(dtype).itemsize
    return SUBLANES * max(1, 4 // itemsize)


def _wmse_kernel(p_ref, t_ref, sq_out_ref, cnt_out_ref, *,
                 n_elems, row_tile, steps_per_shard, num_full_blocks,
                 emit_masked):
    c = pl.program_id(0)          # TensorCore shard (parallel axis)
    i = pl.program_id(1)          # reduction step within the shard (arbitrary)

    # Output blocks are the per-shard accumulators (resident across the i axis).
    @pl.when(i == 0)
    def _():
        sq_out_ref[...] = jnp.zeros_like(sq_out_ref)
        cnt_out_ref[...] = jnp.zeros_like(cnt_out_ref)

    # Stream native dtype; upcast per tile (v5e has no bf16 VPU path).
    p = p_ref[...].astype(jnp.float32)
    t = t_ref[...].astype(jnp.float32)

    diff = p - t
    sq = diff * diff
    cnt = (p < t).astype(jnp.float32)       # elementwise weight = 1 + cnt

    def accumulate(sq_v, cnt_v):
        # (row_tile, 128) -> (row_tile//8, 8, 128); leading-axis sum is pure
        # VALU vreg adds (no XLU), then a single (8,128) vreg RMW per output.
        sq3 = sq_v.reshape(row_tile // SUBLANES, SUBLANES, LANES)
        cnt3 = cnt_v.reshape(row_tile // SUBLANES, SUBLANES, LANES)
        sq_out_ref[...] += jnp.sum(sq3, axis=0)
        cnt_out_ref[...] += jnp.sum(cnt3, axis=0)

    if emit_masked:
        g = c * steps_per_shard + i         # global block index (unclamped)

        def masked_accumulate():
            # Mask on the flat element index: covers the ragged last row/lanes,
            # the partial last block's garbage rows, and shard-overflow blocks.
            row_ids = jax.lax.broadcasted_iota(jnp.int32, (row_tile, LANES), 0)
            lane_ids = jax.lax.broadcasted_iota(jnp.int32, (row_tile, LANES), 1)
            global_row = g * row_tile + row_ids
            valid = global_row * LANES + lane_ids < n_elems
            accumulate(jnp.where(valid, sq, 0.0), jnp.where(valid, cnt, 0.0))

        if num_full_blocks > 0:
            @pl.when(g < num_full_blocks)
            def _():
                accumulate(sq, cnt)         # full blocks: no mask VALU work

            @pl.when(g >= num_full_blocks)
            def _():
                masked_accumulate()
        else:
            masked_accumulate()
    else:
        accumulate(sq, cnt)


def weighted_mse_loss(predictions, targets, *, row_tile=DEFAULT_ROW_TILE):
    assert predictions.shape == targets.shape
    n_elems = predictions.size
    assert n_elems > 0

    p_flat = predictions.reshape(-1)
    t_flat = targets.reshape(-1)

    # The (rows, 128) reshape needs a multiple of 128 elements; the in-kernel
    # flat-index mask makes the pad contents irrelevant.
    n_pad = (-n_elems) % LANES
    if n_pad:
        p_flat = jnp.pad(p_flat, (0, n_pad))
        t_flat = jnp.pad(t_flat, (0, n_pad))

    rows = p_flat.size // LANES
    p2d = p_flat.reshape(rows, LANES)
    t2d = t_flat.reshape(rows, LANES)

    # Big lane-dense tiles; clamp for small inputs, keep dtype sublane packing.
    sub = max(_sublane_pack(p2d.dtype), _sublane_pack(t2d.dtype))
    row_tile = min(row_tile, _round_up(rows, sub))
    row_tile = max(sub, _round_up(row_tile, sub))

    total_blocks = pl.cdiv(rows, row_tile)
    num_shards = 2 if total_blocks >= 2 else 1          # 2 TCs on v7x; free elsewhere
    steps_per_shard = pl.cdiv(total_blocks, num_shards)
    num_grid_blocks = num_shards * steps_per_shard
    # Blocks whose every element is a real input element (no masking needed).
    num_full_blocks = n_elems // (row_tile * LANES)
    emit_masked = num_grid_blocks != num_full_blocks

    if num_grid_blocks == total_blocks:
        def in_idx(c, i):
            return (c * steps_per_shard + i, 0)
    else:
        def in_idx(c, i):
            # Clamp shard-overflow steps onto the last real block; their
            # contribution is masked out in-kernel.
            return (jnp.minimum(c * steps_per_shard + i, total_blocks - 1), 0)

    bytes_in = p2d.size * p2d.dtype.itemsize + t2d.size * t2d.dtype.itemsize
    out_rows = num_shards * SUBLANES
    cost = pl.CostEstimate(flops=5 * n_elems, transcendentals=0,
                           bytes_accessed=bytes_in + 2 * out_rows * LANES * 4)

    kernel = functools.partial(
        _wmse_kernel, n_elems=n_elems, row_tile=row_tile,
        steps_per_shard=steps_per_shard, num_full_blocks=num_full_blocks,
        emit_masked=emit_masked)

    sq_part, cnt_part = pl.pallas_call(
        kernel,
        out_shape=(
            jax.ShapeDtypeStruct((out_rows, LANES), jnp.float32),
            jax.ShapeDtypeStruct((out_rows, LANES), jnp.float32),
        ),
        grid_spec=pltpu.PrefetchScalarGridSpec(
            num_scalar_prefetch=0,
            grid=(num_shards, steps_per_shard),
            in_specs=[
                pl.BlockSpec((row_tile, LANES), in_idx),
                pl.BlockSpec((row_tile, LANES), in_idx),
            ],
            out_specs=[
                pl.BlockSpec((SUBLANES, LANES), lambda c, i: (c, 0)),
                pl.BlockSpec((SUBLANES, LANES), lambda c, i: (c, 0)),
            ],
        ),
        compiler_params=pltpu.CompilerParams(
            dimension_semantics=("parallel", "arbitrary"),
        ),
        cost_estimate=cost,
    )(p2d, t2d)

    # Tiny (num_shards*8, 128) partials -> scalars in XLA.
    inv_n = jnp.float32(1.0 / n_elems)
    mse = jnp.sum(sq_part) * inv_n
    mean_w = 1.0 + jnp.sum(cnt_part) * inv_n
    return (mse * mean_w).astype(jnp.float32)


def weighted_mse_loss_ref(predictions, targets):
    p = predictions.astype(jnp.float32)
    t = targets.astype(jnp.float32)
    loss = jnp.mean((p - t) ** 2)
    weight = jnp.where(p < t, 2.0, 1.0)
    return jnp.mean(loss * weight)


if __name__ == "__main__":
    key = jax.random.PRNGKey(0)
    k1, k2, k3, k4 = jax.random.split(key, 4)

    # Primary case: typical prediction/target pair (f32, lane-aligned count).
    predictions = jax.random.normal(k1, (2, 4, 16, 16), dtype=jnp.float32)
    targets = jax.random.normal(k2, (2, 4, 16, 16), dtype=jnp.float32)
    out = jax.block_until_ready(weighted_mse_loss(predictions, targets))
    ref = weighted_mse_loss_ref(predictions, targets)
    assert jnp.allclose(out, ref, rtol=1e-5, atol=1e-6), (out, ref)

    # Ragged + native bf16 case: exercises flat-index masking, bf16 sublane
    # packing clamp, and narrow-dtype streaming.
    p_bf = jax.random.normal(k3, (3, 5, 7, 5), dtype=jnp.bfloat16)
    t_bf = jax.random.normal(k4, (3, 5, 7, 5), dtype=jnp.bfloat16)
    out_bf = jax.block_until_ready(weighted_mse_loss(p_bf, t_bf))
    ref_bf = weighted_mse_loss_ref(p_bf, t_bf)
    assert jnp.allclose(out_bf, ref_bf, rtol=1e-4, atol=1e-6), (out_bf, ref_bf)

    # Larger multi-block case: exercises 2-way shard axis + full/masked split.
    k5, k6 = jax.random.split(k1)
    p_big = jax.random.normal(k5, (5, 300, 257), dtype=jnp.float32)
    t_big = jax.random.normal(k6, (5, 300, 257), dtype=jnp.float32)
    out_big = jax.block_until_ready(
        weighted_mse_loss(p_big, t_big, row_tile=512))
    ref_big = weighted_mse_loss_ref(p_big, t_big)
    assert jnp.allclose(out_big, ref_big, rtol=1e-5, atol=1e-6), (out_big, ref_big)

    print("KERNEL_OK")
</pallas_src>

<mosaic_0001>
module attributes {stable_mosaic.version = 11 : i64} {
  func.func @_wmse_kernel(%arg0: i32, %arg1: i32, %arg2: memref<16x128xf32, #tpu.memory_space<vmem>>, %arg3: memref<16x128xf32, #tpu.memory_space<vmem>>, %arg4: memref<8x128xf32, #tpu.memory_space<vmem>>, %arg5: memref<8x128xf32, #tpu.memory_space<vmem>>) attributes {dimension_semantics = [#tpu.dimension_semantics<parallel>, #tpu.dimension_semantics<arbitrary>], iteration_bounds = array<i64: 1, 1>, scalar_prefetch = 0 : i64, scratch_operands = 0 : i64, tpu.core_type = #tpu.core_type<tc>, window_params = [{transform_indices = @transform_0, window_bounds = array<i64: 16, 128>}, {transform_indices = @transform_1, window_bounds = array<i64: 16, 128>}, {transform_indices = @transform_2, window_bounds = array<i64: 8, 128>}, {transform_indices = @transform_3, window_bounds = array<i64: 8, 128>}]} {
    %c0_i32 = arith.constant 0 : i32
    %0 = arith.cmpi eq, %arg1, %c0_i32 : i32
    %1 = arith.extui %0 : i1 to i32
    %c0_i32_0 = arith.constant 0 : i32
    %2 = arith.cmpi ne, %1, %c0_i32_0 : i32
    scf.if %2 {
      %cst_13 = arith.constant 0.000000e+00 : f32
      %20 = vector.broadcast %cst_13 : f32 to vector<8x128xf32>
      %c0_14 = arith.constant 0 : index
      %c0_15 = arith.constant 0 : index
      %21 = vector.load %arg4[%c0_14, %c0_15] : memref<8x128xf32, #tpu.memory_space<vmem>>, vector<8x128xf32>
      tpu.vector_store %arg4[%c0_14, %c0_15], %20 {strides = array<i32>} : memref<8x128xf32, #tpu.memory_space<vmem>>, vector<8x128xf32>,
      %cst_16 = arith.constant 0.000000e+00 : f32
      %22 = vector.broadcast %cst_16 : f32 to vector<8x128xf32>
      %c0_17 = arith.constant 0 : index
      %c0_18 = arith.constant 0 : index
      %23 = vector.load %arg5[%c0_17, %c0_18] : memref<8x128xf32, #tpu.memory_space<vmem>>, vector<8x128xf32>
      tpu.vector_store %arg5[%c0_17, %c0_18], %22 {strides = array<i32>} : memref<8x128xf32, #tpu.memory_space<vmem>>, vector<8x128xf32>,
    } else {
    }
    %c0 = arith.constant 0 : index
    %c0_1 = arith.constant 0 : index
    %3 = vector.load %arg2[%c0, %c0_1] : memref<16x128xf32, #tpu.memory_space<vmem>>, vector<16x128xf32>
    %c0_2 = arith.constant 0 : index
    %c0_3 = arith.constant 0 : index
    %4 = vector.load %arg3[%c0_2, %c0_3] : memref<16x128xf32, #tpu.memory_space<vmem>>, vector<16x128xf32>
    %5 = arith.subf %3, %4 : vector<16x128xf32>
    %6 = arith.mulf %5, %5 : vector<16x128xf32>
    %7 = arith.cmpf olt, %3, %4 : vector<16x128xf32>
    %8 = arith.extui %7 : vector<16x128xi1> to vector<16x128xi32>
    %9 = arith.sitofp %8 : vector<16x128xi32> to vector<16x128xf32>
    %10 = vector.shape_cast %6 : vector<16x128xf32> to vector<2x8x128xf32>
    %11 = vector.shape_cast %9 : vector<16x128xf32> to vector<2x8x128xf32>
    %c0_4 = arith.constant 0 : index
    %c0_5 = arith.constant 0 : index
    %12 = vector.load %arg4[%c0_4, %c0_5] : memref<8x128xf32, #tpu.memory_space<vmem>>, vector<8x128xf32>
    %cst = arith.constant dense<0.000000e+00> : vector<8x128xf32>
    %13 = vector.multi_reduction <add>, %10, %cst [0] : vector<2x8x128xf32> to vector<8x128xf32>
    %14 = arith.addf %12, %13 : vector<8x128xf32>
    %c0_6 = arith.constant 0 : index
    %c0_7 = arith.constant 0 : index
    %15 = vector.load %arg4[%c0_6, %c0_7] : memref<8x128xf32, #tpu.memory_space<vmem>>, vector<8x128xf32>
    tpu.vector_store %arg4[%c0_6, %c0_7], %14 {strides = array<i32>} : memref<8x128xf32, #tpu.memory_space<vmem>>, vector<8x128xf32>,
    %c0_8 = arith.constant 0 : index
    %c0_9 = arith.constant 0 : index
    %16 = vector.load %arg5[%c0_8, %c0_9] : memref<8x128xf32, #tpu.memory_space<vmem>>, vector<8x128xf32>
    %cst_10 = arith.constant dense<0.000000e+00> : vector<8x128xf32>
    %17 = vector.multi_reduction <add>, %11, %cst_10 [0] : vector<2x8x128xf32> to vector<8x128xf32>
    %18 = arith.addf %16, %17 : vector<8x128xf32>
    %c0_11 = arith.constant 0 : index
    %c0_12 = arith.constant 0 : index
    %19 = vector.load %arg5[%c0_11, %c0_12] : memref<8x128xf32, #tpu.memory_space<vmem>>, vector<8x128xf32>
    tpu.vector_store %arg5[%c0_11, %c0_12], %18 {strides = array<i32>} : memref<8x128xf32, #tpu.memory_space<vmem>>, vector<8x128xf32>,
    return
  }
  func.func @transform_0(%arg0: i32, %arg1: i32) -> (i32, i32) {
    %c1_i32 = arith.constant 1 : i32
    %0 = arith.muli %arg0, %c1_i32 : i32
    %1 = arith.addi %0, %arg1 : i32
    %c0_i32 = arith.constant 0 : i32
    %c0_i32_0 = arith.constant 0 : i32
    return %1, %c0_i32 : i32, i32
  }
  func.func @transform_1(%arg0: i32, %arg1: i32) -> (i32, i32) {
    %c1_i32 = arith.constant 1 : i32
    %0 = arith.muli %arg0, %c1_i32 : i32
    %1 = arith.addi %0, %arg1 : i32
    %c0_i32 = arith.constant 0 : i32
    %c0_i32_0 = arith.constant 0 : i32
    return %1, %c0_i32 : i32, i32
  }
  func.func @transform_2(%arg0: i32, %arg1: i32) -> (i32, i32) {
    %c0_i32 = arith.constant 0 : i32
    %c0_i32_0 = arith.constant 0 : i32
    return %arg0, %c0_i32 : i32, i32
  }
  func.func @transform_3(%arg0: i32, %arg1: i32) -> (i32, i32) {
    %c0_i32 = arith.constant 0 : i32
    %c0_i32_0 = arith.constant 0 : i32
    return %arg0, %c0_i32 : i32, i32
  }
}

</mosaic_0001>

<llo_original>
// kernel: tpu_custom_call.1
$region0: #{tpu_custom_call.1}
  #allocation0 [shape = 'u32[]', space=smem, size = 0x4, offset = 0x4, fixed_abs, tag = 'smem constant byte address 0x4 - core index']
  #allocation1 [shape = 'u32[72,128]{1,0:T(1,128)}', space=vmem, size = 0x9000, scoped, tag = 'internal scratch']
  %s0 = inlined_call_operand.hbm [shape: f32[16,128], index: 0, kind: input, shape index: {}]
  %s1 = inlined_call_operand.hbm [shape: f32[16,128], index: 1, kind: input, shape index: {}]
  %s2 = inlined_call_operand.hbm [shape: f32[8,128], index: 2, kind: output, shape index: {0}]
  %s3 = inlined_call_operand.hbm [shape: f32[8,128], index: 3, kind: output, shape index: {1}]
  %4 = xla_tuple %s2, %s3
  %s5 = sld [smem:[#allocation0]]
  $region38: #{tpu_custom_call.1} parent=0
    _
  %s7 = ssub.s32 1, %s5
  %s8 = scalar_select 0, %s7, %s5
  $region1: #{tpu_custom_call.1} parent=0
    #allocation2 [shape = 'u8[8192]{0}', space=vmem, size = 0x2000, scoped, tag = 'input window, operand 0, single buffered']
    #allocation3 [shape = 's32[1]{0}', space=sflag, size = 0x4, scoped, tag = 'scoped memory for tpu_custom_call.1']
    #allocation4 [shape = 's32[1]{0}', space=sflag, size = 0x4, scoped, tag = 'scoped memory for tpu_custom_call.1']
    #allocation5 [shape = 'u8[8192]{0}', space=vmem, size = 0x2000, scoped, tag = 'input window, operand 1, single buffered']
    #allocation6 [shape = 's32[1]{0}', space=sflag, size = 0x4, scoped, tag = 'scoped memory for tpu_custom_call.1']
    #allocation7 [shape = 'u8[4096]{0}', space=vmem, size = 0x1000, scoped, tag = 'output window, operand 0, single buffered']
    #allocation8 [shape = 'u8[4096]{0}', space=vmem, size = 0x1000, scoped, tag = 'output window, operand 1, single buffered']
    #allocation9 [shape = 's32[1]{0}', space=sflag, size = 0x4, scoped, tag = 'scoped memory for tpu_custom_call.1']
    %9 = vsyncpa [#allocation3], 0
    %10 = vsyncpa [#allocation6], 0
    %11 = vsyncpa [#allocation4], 0
    %12 = vsyncpa [#allocation9], 0
    // Predicated region
    $region2: #{tpu_custom_call.1} parent=1 // pred_check
      _
    $region3: #{tpu_custom_call.1} parent=1 // pred_check_branch
      %14 = sbr.rel (0) target = $region5
    $region4: #{tpu_custom_call.1} parent=1 // pred_region
      %s15 = sadd.s32 0, 0
      %s16 = smul.u32 2, %s15
      %18 = vsyncadd [#allocation3], 0
      %s19 = smul.addr %s16, 8
      %s20 = scalar_lea.hbm %s0, %s19
      %s21 = sshll.u32 %s20, 4
      %s22 = int_to_ptr.hbm [resolvable:$true] %s21
      %s23 = sshll.u32 [#allocation2], 4
      %s24 = int_to_ptr.vmem [resolvable:$true] %s23
      %29 = dma.hbm_to_vmem [thread:$0]  %s22, 256, %s24, [#allocation3], 128, 128, 8
    $region5: #{tpu_custom_call.1} parent=1 // pred_fallthru
      _
    // Predicated region
    $region6: #{tpu_custom_call.1} parent=1 // pred_check
      _
    $region7: #{tpu_custom_call.1} parent=1 // pred_check_branch
      %31 = sbr.rel (0) target = $region9
    $region8: #{tpu_custom_call.1} parent=1 // pred_region
      %s32 = sadd.s32 0, 0
      %s33 = smul.u32 2, %s32
      %35 = vsyncadd [#allocation6], 0
      %s36 = smul.addr %s33, 8
      %s37 = scalar_lea.hbm %s1, %s36
      %s38 = sshll.u32 %s37, 4
      %s39 = int_to_ptr.hbm [resolvable:$true] %s38
      %s40 = sshll.u32 [#allocation5], 4
      %s41 = int_to_ptr.vmem [resolvable:$true] %s40
      %46 = dma.hbm_to_vmem [thread:$0]  %s39, 256, %s41, [#allocation6], 128, 128, 8
    $region9: #{tpu_custom_call.1} parent=1 // pred_fallthru
      _
    // Predicated region
    $region10: #{tpu_custom_call.1} parent=1 // pred_check
      _
    $region11: #{tpu_custom_call.1} parent=1 // pred_check_branch
      %48 = sbr.rel (0) target = $region13
    $region12: #{tpu_custom_call.1} parent=1 // pred_region
      %50 = dma.done [#allocation3], 256
    $region13: #{tpu_custom_call.1} parent=1 // pred_fallthru
      _
    // Predicated region
    $region14: #{tpu_custom_call.1} parent=1 // pred_check
      _
    $region15: #{tpu_custom_call.1} parent=1 // pred_check_branch
      %52 = sbr.rel (0) target = $region17
    $region16: #{tpu_custom_call.1} parent=1 // pred_region
      %54 = dma.done [#allocation6], 256
    $region17: #{tpu_custom_call.1} parent=1 // pred_fallthru
      _
    %s55 = sadd.s32 0, 0
    %s56 = smul.u32 2, %s55
    %s57 = sadd.s32 0, 0
    %s58 = smul.u32 2, %s57
    %p59 = scmp.eq.s32.totalorder 0, 0
    // Predicated region
    $region18: #{tpu_custom_call.1} parent=1 // pred_check
      %p60 = pneg %p59
    $region19: #{tpu_custom_call.1} parent=1 // pred_check_branch
      %62 = sbr.rel (%p60) target = $region21
    $region20: #{tpu_custom_call.1} parent=1 // pred_region
      %63 = vst [vmem:[#allocation7] sm:$0xff] 0.0
      %64 = vst [vmem:[#allocation8] sm:$0xff] 0.0
    $region21: #{tpu_custom_call.1} parent=1 // pred_fallthru
      _
    %v65 = vld [vmem:[#allocation2] sm:$0xff]
    %v66 = vld [vmem:[#allocation2 + $0x8] sm:$0xff]
    %v67 = vld [vmem:[#allocation5] sm:$0xff]
    %v68 = vld [vmem:[#allocation5 + $0x8] sm:$0xff]
    %v69 = vsub.f32 %v65, %v67
    %v70 = vsub.f32 %v66, %v68
    %v71 = vmul.f32 %v69, %v69
    %v72 = vmul.f32 %v70, %v70
    %vm73 = vcmp.lt.f32.partialorder %v65, %v67
    %vm74 = vcmp.lt.f32.partialorder %v66, %v68
    %v75 = vsel %vm73, 1, 0
    %v76 = vsel %vm74, 1, 0
    %v77 = vcvt.s32.f32 %v75
    %v78 = vcvt.s32.f32 %v76
    %v79 = vld [vmem:[#allocation7] sm:$0xff]
    %v80 = vadd.f32 %v71, %v72
    %v81 = vadd.f32 %v79, %v80
    %82 = vst [vmem:[#allocation7] sm:$0xff] %v81
    %v83 = vld [vmem:[#allocation8] sm:$0xff]
    %v84 = vadd.f32 %v77, %v78
    %v85 = vadd.f32 %v83, %v84
    %86 = vst [vmem:[#allocation8] sm:$0xff] %v85
    // Predicated region
    $region22: #{tpu_custom_call.1} parent=1 // pred_check
      _
    $region23: #{tpu_custom_call.1} parent=1 // pred_check_branch
      %88 = sbr.rel (0) target = $region25
    $region24: #{tpu_custom_call.1} parent=1 // pred_region
      %90 = vsyncadd [#allocation4], 0
      %s92 = sshll.u32 [#allocation7], 4
      %s93 = int_to_ptr.vmem [resolvable:$true] %s92
      %s94 = sshll.u32 %s2, 4
      %s95 = int_to_ptr.hbm [resolvable:$true] %s94
      %97 = dma.vmem_to_hbm [thread:$0]  %s93, 128, %s95, [#allocation4]
    $region25: #{tpu_custom_call.1} parent=1 // pred_fallthru
      _
    // Predicated region
    $region26: #{tpu_custom_call.1} parent=1 // pred_check
      _
    $region27: #{tpu_custom_call.1} parent=1 // pred_check_branch
      %99 = sbr.rel (0) target = $region29
    $region28: #{tpu_custom_call.1} parent=1 // pred_region
      %101 = vsyncadd [#allocation9], 0
      %s103 = sshll.u32 [#allocation8], 4
      %s104 = int_to_ptr.vmem [resolvable:$true] %s103
      %s105 = sshll.u32 %s3, 4
      %s106 = int_to_ptr.hbm [resolvable:$true] %s105
      %108 = dma.vmem_to_hbm [thread:$0]  %s104, 128, %s106, [#allocation9]
    $region29: #{tpu_custom_call.1} parent=1 // pred_fallthru
      _
    // Predicated region
    $region30: #{tpu_custom_call.1} parent=1 // pred_check
      _
    $region31: #{tpu_custom_call.1} parent=1 // pred_check_branch
      %110 = sbr.rel (0) target = $region33
    $region32: #{tpu_custom_call.1} parent=1 // pred_region
      %112 = dma.done [#allocation4], 128
    $region33: #{tpu_custom_call.1} parent=1 // pred_fallthru
      _
    // Predicated region
    $region34: #{tpu_custom_call.1} parent=1 // pred_check
      _
    $region35: #{tpu_custom_call.1} parent=1 // pred_check_branch
      %114 = sbr.rel (0) target = $region37
    $region36: #{tpu_custom_call.1} parent=1 // pred_region
      %116 = dma.done [#allocation9], 128
    $region37: #{tpu_custom_call.1} parent=1 // pred_fallthru
      _
    %117 = vsyncpa [#allocation3], 1
    %118 = vsyncpa [#allocation6], 1
    %119 = vsyncpa [#allocation4], 1
    %120 = vsyncpa [#allocation9], 1

</llo_original>
